<compile_context>
chip_gen: v6e
topology: v6e:2x2x1
jax: 0.10.0
libtpu: 0.0.40
codegen_flags: <defaults>
</compile_context>

<pallas_src>
import jax
import jax.numpy as jnp
from jax.experimental import pallas as pl
from jax.experimental.pallas import tpu as pltpu

IN_DIM = 640      # already a multiple of 128
HID_DIM = 100
OUT_DIM = 100
PAD_DIM = 128     # lane-dense padded width for the hidden dim


def _mlp_kernel(x_ref, w1_ref, b1_ref, w2_ref, b2_ref, o_ref):
    # bf16 MXU feeds, f32 accumulation.
    x = x_ref[...].astype(jnp.bfloat16)
    # (tb, 640) @ (640, 128) + (1, 128)
    h = jnp.dot(x, w1_ref[...], preferred_element_type=jnp.float32)
    h = h + b1_ref[...]
    # LeakyReLU(0.1): single VPU max (identical to where/select for alpha in (0,1)).
    h = jnp.maximum(h, 0.1 * h)
    # (tb, 128) @ (128, 100) + (1, 100)  -- masked-lane store handled by Mosaic.
    out = jnp.dot(h.astype(jnp.bfloat16), w2_ref[...],
                  preferred_element_type=jnp.float32)
    out = out + b2_ref[...]
    o_ref[...] = out.astype(o_ref.dtype)


def _round_up(x, m):
    return ((x + m - 1) // m) * m


def _choose_tile(B, tile_b):
    if B > tile_b:
        return tile_b
    if B >= 64:
        # Split into >=2 tiles so v7x's second TensorCore gets work
        # (harmless on single-TC v5e/v6e).  Multiple of 16 for bf16 sublanes.
        return max(16, min(tile_b, _round_up(pl.cdiv(B, 2), 16)))
    # Tiny batch: one tile equal to the full batch dim (always a legal block).
    return B


def prepare_kmeans_params(w1, b1, w2, b2):
    """One-time padding + bf16 cast of the parameters (hoist out of the forward).

    w1: (640, 100), b1: (100,), w2: (100, 100), b2: (100,), stored (in, out),
    i.e. transposed relative to PyTorch's (out, in) Linear weights.
    """
    w1p = jnp.zeros((IN_DIM, PAD_DIM), jnp.bfloat16).at[:, :HID_DIM].set(
        w1.astype(jnp.bfloat16))
    b1p = jnp.zeros((1, PAD_DIM), jnp.float32).at[:, :HID_DIM].set(
        b1.astype(jnp.float32))
    w2p = jnp.zeros((PAD_DIM, OUT_DIM), jnp.bfloat16).at[:HID_DIM, :].set(
        w2.astype(jnp.bfloat16))
    b2p = b2.astype(jnp.float32).reshape(1, OUT_DIM)
    return w1p, b1p, w2p, b2p


def kmeans_model_forward(x, params, *, tile_b=1024):
    """x: (B, 640); params from prepare_kmeans_params.  Returns (B, 100) f32."""
    w1p, b1p, w2p, b2p = params
    B = x.shape[0]

    tb = _choose_tile(B, tile_b)
    grid = (pl.cdiv(B, tb),)   # ragged last tile handled by Pallas boundary masking

    out = pl.pallas_call(
        _mlp_kernel,
        out_shape=jax.ShapeDtypeStruct((B, OUT_DIM), jnp.float32),
        grid=grid,
        in_specs=[
            pl.BlockSpec((tb, IN_DIM), lambda i: (i, 0)),        # streamed x tiles
            pl.BlockSpec((IN_DIM, PAD_DIM), lambda i: (0, 0)),   # resident W1 (bf16)
            pl.BlockSpec((1, PAD_DIM), lambda i: (0, 0)),        # resident b1 (f32)
            pl.BlockSpec((PAD_DIM, OUT_DIM), lambda i: (0, 0)),  # resident W2 (bf16)
            pl.BlockSpec((1, OUT_DIM), lambda i: (0, 0)),        # resident b2 (f32)
        ],
        out_specs=pl.BlockSpec((tb, OUT_DIM), lambda i: (i, 0)),
        compiler_params=pltpu.CompilerParams(
            dimension_semantics=("parallel",),
            vmem_limit_bytes=32 * 1024 * 1024,
        ),
    )(x, w1p, b1p, w2p, b2p)
    return out


def _init_params(key):
    """Deterministic init mimicking nn.Linear defaults (uniform +/- 1/sqrt(fan_in))."""
    k1, k2, k3, k4 = jax.random.split(key, 4)
    bound1 = 1.0 / jnp.sqrt(float(IN_DIM))
    bound2 = 1.0 / jnp.sqrt(float(HID_DIM))
    # Stored as (in, out) = transposed relative to PyTorch's (out, in).
    w1 = jax.random.uniform(k1, (IN_DIM, HID_DIM), jnp.float32, -bound1, bound1)
    b1 = jax.random.uniform(k2, (HID_DIM,), jnp.float32, -bound1, bound1)
    w2 = jax.random.uniform(k3, (HID_DIM, OUT_DIM), jnp.float32, -bound2, bound2)
    b2 = jax.random.uniform(k4, (OUT_DIM,), jnp.float32, -bound2, bound2)
    return w1, b1, w2, b2


if __name__ == "__main__":
    key = jax.random.PRNGKey(0)
    kx, kp = jax.random.split(key)

    batch = 8  # small sanity-check shape; kernel is designed for large batches
    x = jax.random.normal(kx, (batch, IN_DIM), dtype=jnp.float32)
    w1, b1, w2, b2 = _init_params(kp)
    params = prepare_kmeans_params(w1, b1, w2, b2)

    out = kmeans_model_forward(x, params)
    out = jax.block_until_ready(out)

    # Pure-JAX reference mimicking the kernel's bf16-input / f32-accumulate matmuls.
    def bf16_round(a):
        return a.astype(jnp.bfloat16).astype(jnp.float32)

    ref_h = bf16_round(x) @ bf16_round(w1) + b1
    ref_h = jnp.maximum(ref_h, 0.1 * ref_h)
    ref = bf16_round(ref_h) @ bf16_round(w2) + b2

    assert out.shape == (batch, OUT_DIM)
    assert bool(jnp.allclose(out, ref, atol=1e-2, rtol=1e-2)), (
        f"max abs err {jnp.max(jnp.abs(out - ref))}")

    print("KERNEL_OK")
</pallas_src>

<mosaic_0001>
module attributes {stable_mosaic.version = 11 : i64} {
  func.func @_mlp_kernel(%arg0: i32, %arg1: memref<8x640xf32, #tpu.memory_space<vmem>>, %arg2: memref<640x128xbf16, #tpu.memory_space<vmem>>, %arg3: memref<1x128xf32, #tpu.memory_space<vmem>>, %arg4: memref<128x100xbf16, #tpu.memory_space<vmem>>, %arg5: memref<1x100xf32, #tpu.memory_space<vmem>>, %arg6: memref<8x100xf32, #tpu.memory_space<vmem>>) attributes {dimension_semantics = [#tpu.dimension_semantics<parallel>], iteration_bounds = array<i64: 1>, scalar_prefetch = 0 : i64, scratch_operands = 0 : i64, tpu.core_type = #tpu.core_type<tc>, window_params = [{transform_indices = @transform_0, window_bounds = array<i64: 8, 640>}, {pipeline_mode = #tpu.pipeline_mode<synchronous>, transform_indices = @transform_1, window_bounds = array<i64: 640, 128>}, {pipeline_mode = #tpu.pipeline_mode<synchronous>, transform_indices = @transform_2, window_bounds = array<i64: 1, 128>}, {pipeline_mode = #tpu.pipeline_mode<synchronous>, transform_indices = @transform_3, window_bounds = array<i64: 128, 100>}, {pipeline_mode = #tpu.pipeline_mode<synchronous>, transform_indices = @transform_4, window_bounds = array<i64: 1, 100>}, {transform_indices = @transform_5, window_bounds = array<i64: 8, 100>}]} {
    %c0 = arith.constant 0 : index
    %c0_0 = arith.constant 0 : index
    %0 = vector.load %arg1[%c0, %c0_0] : memref<8x640xf32, #tpu.memory_space<vmem>>, vector<8x640xf32>
    %1 = arith.truncf %0 : vector<8x640xf32> to vector<8x640xbf16>
    %c0_1 = arith.constant 0 : index
    %c0_2 = arith.constant 0 : index
    %2 = vector.load %arg2[%c0_1, %c0_2] : memref<640x128xbf16, #tpu.memory_space<vmem>>, vector<640x128xbf16>
    %cst = arith.constant dense<0.000000e+00> : vector<8x128xf32>
    %3 = tpu.matmul %1, %2, %cst {dimension_numbers = #tpu.dot_dimension_numbers<[1], [0], [0], [1], [0, 0, 1, 1], [], []>} : vector<8x640xbf16>, vector<640x128xbf16>, vector<8x128xf32> -> vector<8x128xf32>
    %c0_3 = arith.constant 0 : index
    %c0_4 = arith.constant 0 : index
    %4 = vector.load %arg3[%c0_3, %c0_4] : memref<1x128xf32, #tpu.memory_space<vmem>>, vector<1x128xf32>
    %5 = vector.broadcast %4 : vector<1x128xf32> to vector<8x128xf32>
    %6 = arith.addf %3, %5 : vector<8x128xf32>
    %cst_5 = arith.constant 1.000000e-01 : f32
    %7 = vector.broadcast %cst_5 : f32 to vector<8x128xf32>
    %8 = arith.mulf %7, %6 : vector<8x128xf32>
    %9 = arith.maximumf %6, %8 : vector<8x128xf32>
    %10 = arith.truncf %9 : vector<8x128xf32> to vector<8x128xbf16>
    %c0_6 = arith.constant 0 : index
    %c0_7 = arith.constant 0 : index
    %11 = vector.load %arg4[%c0_6, %c0_7] : memref<128x100xbf16, #tpu.memory_space<vmem>>, vector<128x100xbf16>
    %cst_8 = arith.constant dense<0.000000e+00> : vector<8x100xf32>
    %12 = tpu.matmul %10, %11, %cst_8 {dimension_numbers = #tpu.dot_dimension_numbers<[1], [0], [0], [1], [0, 0, 1, 1], [], []>} : vector<8x128xbf16>, vector<128x100xbf16>, vector<8x100xf32> -> vector<8x100xf32>
    %c0_9 = arith.constant 0 : index
    %c0_10 = arith.constant 0 : index
    %13 = vector.load %arg5[%c0_9, %c0_10] : memref<1x100xf32, #tpu.memory_space<vmem>>, vector<1x100xf32>
    %14 = vector.broadcast %13 : vector<1x100xf32> to vector<8x100xf32>
    %15 = arith.addf %12, %14 : vector<8x100xf32>
    %c0_11 = arith.constant 0 : index
    %c0_12 = arith.constant 0 : index
    %16 = vector.load %arg6[%c0_11, %c0_12] : memref<8x100xf32, #tpu.memory_space<vmem>>, vector<8x100xf32>
    tpu.vector_store %arg6[%c0_11, %c0_12], %15 {strides = array<i32>} : memref<8x100xf32, #tpu.memory_space<vmem>>, vector<8x100xf32>,
    return
  }
  func.func @transform_0(%arg0: i32) -> (i32, i32) {
    %c0_i32 = arith.constant 0 : i32
    %c0_i32_0 = arith.constant 0 : i32
    return %arg0, %c0_i32 : i32, i32
  }
  func.func @transform_1(%arg0: i32) -> (i32, i32) {
    %c0_i32 = arith.constant 0 : i32
    %c0_i32_0 = arith.constant 0 : i32
    %c0_i32_1 = arith.constant 0 : i32
    return %c0_i32, %c0_i32_0 : i32, i32
  }
  func.func @transform_2(%arg0: i32) -> (i32, i32) {
    %c0_i32 = arith.constant 0 : i32
    %c0_i32_0 = arith.constant 0 : i32
    %c0_i32_1 = arith.constant 0 : i32
    return %c0_i32, %c0_i32_0 : i32, i32
  }
  func.func @transform_3(%arg0: i32) -> (i32, i32) {
    %c0_i32 = arith.constant 0 : i32
    %c0_i32_0 = arith.constant 0 : i32
    %c0_i32_1 = arith.constant 0 : i32
    return %c0_i32, %c0_i32_0 : i32, i32
  }
  func.func @transform_4(%arg0: i32) -> (i32, i32) {
    %c0_i32 = arith.constant 0 : i32
    %c0_i32_0 = arith.constant 0 : i32
    %c0_i32_1 = arith.constant 0 : i32
    return %c0_i32, %c0_i32_0 : i32, i32
  }
  func.func @transform_5(%arg0: i32) -> (i32, i32) {
    %c0_i32 = arith.constant 0 : i32
    %c0_i32_0 = arith.constant 0 : i32
    return %arg0, %c0_i32 : i32, i32
  }
}

</mosaic_0001>

<llo_original>
// kernel: tpu_custom_call.1
$region0: #{tpu_custom_call.1}
  #allocation0 [shape = 'u32[]', space=smem, size = 0x4, offset = 0x4, fixed_abs, tag = 'smem constant byte address 0x4 - core index']
  #allocation1 [shape = 'u32[144,128]{1,0:T(1,128)}', space=vmem, size = 0x12000, scoped, tag = 'internal scratch']
  %s0 = inlined_call_operand.vmem [shape: f32[8,640], index: 0, kind: input, shape index: {}]
  %s1 = inlined_call_operand.hbm [shape: bf16[640,128], index: 1, kind: input, shape index: {}]
  %s2 = inlined_call_operand.vmem [shape: f32[1,128], index: 2, kind: input, shape index: {}]
  %s3 = inlined_call_operand.vmem [shape: bf16[128,100], index: 3, kind: input, shape index: {}]
  %s4 = inlined_call_operand.vmem [shape: f32[1,100], index: 4, kind: input, shape index: {}]
  %s5 = inlined_call_operand.hbm [shape: f32[8,100], index: 5, kind: output, shape index: {}]
  %s6 = sld [smem:[#allocation0]]
  $region34: #{tpu_custom_call.1} parent=0
    _
  %s8 = ssub.s32 1, %s6
  %s9 = scalar_select 0, %s8, %s6
  $region1: #{tpu_custom_call.1} parent=0
    #allocation2 [shape = 'u8[163840]{0}', space=vmem, size = 0x28000, scoped, tag = 'input window, operand 1, single buffered']
    #allocation3 [shape = 's32[1]{0}', space=sflag, size = 0x4, scoped, tag = 'scoped memory for tpu_custom_call.1']
    #allocation4 [shape = 's32[1]{0}', space=sflag, size = 0x4, scoped, tag = 'scoped memory for tpu_custom_call.1']
    #allocation5 [shape = 'u8[4096]{0}', space=vmem, size = 0x1000, scoped, tag = 'output window, operand 0, single buffered']
    %10 = vsyncpa [#allocation3], 0
    %11 = vsyncpa [#allocation4], 0
    // Predicated region
    $region2: #{tpu_custom_call.1} parent=1 // pred_check
      _
    $region3: #{tpu_custom_call.1} parent=1 // pred_check_branch
      %13 = sbr.rel (0) target = $region5
    $region4: #{tpu_custom_call.1} parent=1 // pred_region
      _
    $region5: #{tpu_custom_call.1} parent=1 // pred_fallthru
      _
    // Predicated region
    $region6: #{tpu_custom_call.1} parent=1 // pred_check
      _
    $region7: #{tpu_custom_call.1} parent=1 // pred_check_branch
      %15 = sbr.rel (0) target = $region9
    $region8: #{tpu_custom_call.1} parent=1 // pred_region
      %s17 = ssub.s32 5120, 5120
      %18 = vsyncadd [#allocation3], %s17
      %s19 = sshll.u32 [#allocation2], 4
      %s20 = int_to_ptr.vmem [resolvable:$true] %s19
      %25 = dma.hbm_to_vmem [thread:$0]  %s1, 5120, %s20, [#allocation3], 64, 64, 4
    $region9: #{tpu_custom_call.1} parent=1 // pred_fallthru
      _
    // Predicated region
    $region10: #{tpu_custom_call.1} parent=1 // pred_check
      _
    $region11: #{tpu_custom_call.1} parent=1 // pred_check_branch
      %27 = sbr.rel (0) target = $region13
    $region12: #{tpu_custom_call.1} parent=1 // pred_region
      _
    $region13: #{tpu_custom_call.1} parent=1 // pred_fallthru
      _
    // Predicated region
    $region14: #{tpu_custom_call.1} parent=1 // pred_check
      _
    $region15: #{tpu_custom_call.1} parent=1 // pred_check_branch
      %29 = sbr.rel (0) target = $region17
    $region16: #{tpu_custom_call.1} parent=1 // pred_region
      _
    $region17: #{tpu_custom_call.1} parent=1 // pred_fallthru
      _
    // Predicated region
    $region18: #{tpu_custom_call.1} parent=1 // pred_check
      _
    $region19: #{tpu_custom_call.1} parent=1 // pred_check_branch
      %31 = sbr.rel (0) target = $region21
    $region20: #{tpu_custom_call.1} parent=1 // pred_region
      _
    $region21: #{tpu_custom_call.1} parent=1 // pred_fallthru
      _
    // Predicated region
    $region22: #{tpu_custom_call.1} parent=1 // pred_check
      _
    $region23: #{tpu_custom_call.1} parent=1 // pred_check_branch
      %33 = sbr.rel (0) target = $region25
    $region24: #{tpu_custom_call.1} parent=1 // pred_region
      %34 = dma.done [#allocation3], 5120
    $region25: #{tpu_custom_call.1} parent=1 // pred_fallthru
      _
    %v36 = vld [vmem:[%s0] sm:$0xff]
    %v37 = vld [vmem:[%s0 + $0x8] sm:$0xff]
    %v38 = vld [vmem:[%s0 + $0x10] sm:$0xff]
    %v39 = vld [vmem:[%s0 + $0x18] sm:$0xff]
    %v40 = vld [vmem:[%s0 + $0x20] sm:$0xff]
    %v41 = vpack.c.bf16 %v36, %v36
    %v42 = vpack.c.bf16 %v37, %v37
    %v43 = vpack.c.bf16 %v38, %v38
    %v44 = vpack.c.bf16 %v39, %v39
    %v45 = vpack.c.bf16 %v40, %v40
    %v46 = vld [vmem:[#allocation2] sm:$0xf]
    %v47 = vld [vmem:[#allocation2 + $0x4] sm:$0xf]
    %v48 = vld [vmem:[#allocation2 + $0x8] sm:$0xf]
    %v49 = vld [vmem:[#allocation2 + $0xc] sm:$0xf]
    %v50 = vld [vmem:[#allocation2 + $0x10] sm:$0xf]
    %v51 = vld [vmem:[#allocation2 + $0x14] sm:$0xf]
    %v52 = vld [vmem:[#allocation2 + $0x18] sm:$0xf]
    %v53 = vld [vmem:[#allocation2 + $0x1c] sm:$0xf]
    %v54 = vld [vmem:[#allocation2 + $0x20] sm:$0xf]
    %v55 = vld [vmem:[#allocation2 + $0x24] sm:$0xf]
    %v56 = vld [vmem:[#allocation2 + $0x28] sm:$0xf]
    %v57 = vld [vmem:[#allocation2 + $0x2c] sm:$0xf]
    %v58 = vld [vmem:[#allocation2 + $0x30] sm:$0xf]
    %v59 = vld [vmem:[#allocation2 + $0x34] sm:$0xf]
    %v60 = vld [vmem:[#allocation2 + $0x38] sm:$0xf]
    %v61 = vld [vmem:[#allocation2 + $0x3c] sm:$0xf]
    %v62 = vld [vmem:[#allocation2 + $0x40] sm:$0xf]
    %v63 = vld [vmem:[#allocation2 + $0x44] sm:$0xf]
    %v64 = vld [vmem:[#allocation2 + $0x48] sm:$0xf]
    %v65 = vld [vmem:[#allocation2 + $0x4c] sm:$0xf]
    %v66 = vld [vmem:[#allocation2 + $0x50] sm:$0xf]
    %v67 = vld [vmem:[#allocation2 + $0x54] sm:$0xf]
    %v68 = vld [vmem:[#allocation2 + $0x58] sm:$0xf]
    %v69 = vld [vmem:[#allocation2 + $0x5c] sm:$0xf]
    %v70 = vld [vmem:[#allocation2 + $0x60] sm:$0xf]
    %v71 = vld [vmem:[#allocation2 + $0x64] sm:$0xf]
    %v72 = vld [vmem:[#allocation2 + $0x68] sm:$0xf]
    %v73 = vld [vmem:[#allocation2 + $0x6c] sm:$0xf]
    %v74 = vld [vmem:[#allocation2 + $0x70] sm:$0xf]
    %v75 = vld [vmem:[#allocation2 + $0x74] sm:$0xf]
    %v76 = vld [vmem:[#allocation2 + $0x78] sm:$0xf]
    %v77 = vld [vmem:[#allocation2 + $0x7c] sm:$0xf]
    %v78 = vld [vmem:[#allocation2 + $0x80] sm:$0xf]
    %v79 = vld [vmem:[#allocation2 + $0x84] sm:$0xf]
    %v80 = vld [vmem:[#allocation2 + $0x88] sm:$0xf]
    %v81 = vld [vmem:[#allocation2 + $0x8c] sm:$0xf]
    %v82 = vld [vmem:[#allocation2 + $0x90] sm:$0xf]
    %v83 = vld [vmem:[#allocation2 + $0x94] sm:$0xf]
    %v84 = vld [vmem:[#allocation2 + $0x98] sm:$0xf]
    %v85 = vld [vmem:[#allocation2 + $0x9c] sm:$0xf]
    %v86 = vld [vmem:[#allocation2 + $0xa0] sm:$0xf]
    %v87 = vld [vmem:[#allocation2 + $0xa4] sm:$0xf]
    %v88 = vld [vmem:[#allocation2 + $0xa8] sm:$0xf]
    %v89 = vld [vmem:[#allocation2 + $0xac] sm:$0xf]
    %v90 = vld [vmem:[#allocation2 + $0xb0] sm:$0xf]
    %v91 = vld [vmem:[#allocation2 + $0xb4] sm:$0xf]
    %v92 = vld [vmem:[#allocation2 + $0xb8] sm:$0xf]
    %v93 = vld [vmem:[#allocation2 + $0xbc] sm:$0xf]
    %v94 = vld [vmem:[#allocation2 + $0xc0] sm:$0xf]
    %v95 = vld [vmem:[#allocation2 + $0xc4] sm:$0xf]
    %v96 = vld [vmem:[#allocation2 + $0xc8] sm:$0xf]
    %v97 = vld [vmem:[#allocation2 + $0xcc] sm:$0xf]
    %v98 = vld [vmem:[#allocation2 + $0xd0] sm:$0xf]
    %v99 = vld [vmem:[#allocation2 + $0xd4] sm:$0xf]
    %v100 = vld [vmem:[#allocation2 + $0xd8] sm:$0xf]
    %v101 = vld [vmem:[#allocation2 + $0xdc] sm:$0xf]
    %v102 = vld [vmem:[#allocation2 + $0xe0] sm:$0xf]
    %v103 = vld [vmem:[#allocation2 + $0xe4] sm:$0xf]
    %v104 = vld [vmem:[#allocation2 + $0xe8] sm:$0xf]
    %v105 = vld [vmem:[#allocation2 + $0xec] sm:$0xf]
    %v106 = vld [vmem:[#allocation2 + $0xf0] sm:$0xf]
    %v107 = vld [vmem:[#allocation2 + $0xf4] sm:$0xf]
    %v108 = vld [vmem:[#allocation2 + $0xf8] sm:$0xf]
    %v109 = vld [vmem:[#allocation2 + $0xfc] sm:$0xf]
    %v110 = vld [vmem:[#allocation2 + $0x100] sm:$0xf]
    %v111 = vld [vmem:[#allocation2 + $0x104] sm:$0xf]
    %v112 = vld [vmem:[#allocation2 + $0x108] sm:$0xf]
    %v113 = vld [vmem:[#allocation2 + $0x10c] sm:$0xf]
    %v114 = vld [vmem:[#allocation2 + $0x110] sm:$0xf]
    %v115 = vld [vmem:[#allocation2 + $0x114] sm:$0xf]
    %v116 = vld [vmem:[#allocation2 + $0x118] sm:$0xf]
    %v117 = vld [vmem:[#allocation2 + $0x11c] sm:$0xf]
    %v118 = vld [vmem:[#allocation2 + $0x120] sm:$0xf]
    %v119 = vld [vmem:[#allocation2 + $0x124] sm:$0xf]
    %v120 = vld [vmem:[#allocation2 + $0x128] sm:$0xf]
    %v121 = vld [vmem:[#allocation2 + $0x12c] sm:$0xf]
    %v122 = vld [vmem:[#allocation2 + $0x130] sm:$0xf]
    %v123 = vld [vmem:[#allocation2 + $0x134] sm:$0xf]
    %v124 = vld [vmem:[#allocation2 + $0x138] sm:$0xf]
    %v125 = vld [vmem:[#allocation2 + $0x13c] sm:$0xf]
    %v126 = vld [vmem:[%s2] sm:$0x1]
    %v128 = vlaneseq
    %v129 = vshrl.u32 %v128, 7
    %v130 = vsub.s32 0, %v129
    %v131 = vrot.slane %v126, %v130
    %v213 = vunpack.c.l.b16 %v46
    %v214 = vunpack.c.l.b16 %v47
    %v215 = vunpack.c.l.b16 %v48
    %v216 = vunpack.c.l.b16 %v49
    %v217 = vunpack.c.l.b16 %v50
    %v218 = vunpack.c.l.b16 %v51
    %v219 = vunpack.c.l.b16 %v52
    %v220 = vunpack.c.l.b16 %v53
    %v221 = vunpack.c.l.b16 %v54
    %v222 = vunpack.c.l.b16 %v55
    %v223 = vunpack.c.l.b16 %v56
    %v224 = vunpack.c.l.b16 %v57
    %v225 = vunpack.c.l.b16 %v58
    %v226 = vunpack.c.l.b16 %v59
    %v227 = vunpack.c.l.b16 %v60
    %v228 = vunpack.c.l.b16 %v61
    %v229 = vunpack.c.l.b16 %v62
    %v230 = vunpack.c.l.b16 %v63
    %v231 = vunpack.c.l.b16 %v64
    %v232 = vunpack.c.l.b16 %v65
    %v233 = vunpack.c.l.b16 %v66
    %v234 = vunpack.c.l.b16 %v67
    %v235 = vunpack.c.l.b16 %v68
    %v236 = vunpack.c.l.b16 %v69
    %v237 = vunpack.c.l.b16 %v70
    %v238 = vunpack.c.l.b16 %v71
    %v239 = vunpack.c.l.b16 %v72
    %v240 = vunpack.c.l.b16 %v73
    %v241 = vunpack.c.l.b16 %v74
    %v242 = vunpack.c.l.b16 %v75
    %v243 = vunpack.c.l.b16 %v76
    %v244 = vunpack.c.l.b16 %v77
    %v245 = vunpack.c.l.b16 %v78
    %v246 = vunpack.c.l.b16 %v79
    %v247 = vunpack.c.l.b16 %v80
    %v248 = vunpack.c.l.b16 %v81
    %v249 = vunpack.c.l.b16 %v82
    %v250 = vunpack.c.l.b16 %v83
    %v251 = vunpack.c.l.b16 %v84
    %v252 = vunpack.c.l.b16 %v85
    %v253 = vunpack.c.l.b16 %v86
    %v254 = vunpack.c.l.b16 %v87
    %v255 = vunpack.c.l.b16 %v88
    %v256 = vunpack.c.l.b16 %v89
    %v257 = vunpack.c.l.b16 %v90
    %v258 = vunpack.c.l.b16 %v91
    %v259 = vunpack.c.l.b16 %v92
    %v260 = vunpack.c.l.b16 %v93
    %v261 = vunpack.c.l.b16 %v94
    %v262 = vunpack.c.l.b16 %v95
    %v263 = vunpack.c.l.b16 %v96
    %v264 = vunpack.c.l.b16 %v97
    %v265 = vunpack.c.l.b16 %v98
    %v266 = vunpack.c.l.b16 %v99
    %v267 = vunpack.c.l.b16 %v100
    %v268 = vunpack.c.l.b16 %v101
    %v269 = vunpack.c.l.b16 %v102
    %v270 = vunpack.c.l.b16 %v103
    %v271 = vunpack.c.l.b16 %v104
    %v272 = vunpack.c.l.b16 %v105
    %v273 = vunpack.c.l.b16 %v106
    %v274 = vunpack.c.l.b16 %v107
    %v275 = vunpack.c.l.b16 %v108
    %v276 = vunpack.c.l.b16 %v109
    %v277 = vunpack.c.l.b16 %v110
    %v278 = vunpack.c.l.b16 %v111
    %v279 = vunpack.c.l.b16 %v112
    %v280 = vunpack.c.l.b16 %v113
    %v281 = vunpack.c.l.b16 %v114
    %v282 = vunpack.c.l.b16 %v115
    %v283 = vunpack.c.l.b16 %v116
    %v284 = vunpack.c.l.b16 %v117
    %v285 = vunpack.c.l.b16 %v118
    %v286 = vunpack.c.l.b16 %v119
    %v287 = vunpack.c.l.b16 %v120
    %v288 = vunpack.c.l.b16 %v121
    %v289 = vunpack.c.l.b16 %v122
    %v290 = vunpack.c.l.b16 %v123
    %v291 = vunpack.c.l.b16 %v124
    %v292 = vunpack.c.l.b16 %v125
    %v293 = vpack.c.b16 %v214, %v213
    %v294 = vpack.c.b16 %v216, %v215
    %v295 = vpack.c.b16 %v218, %v217
    %v296 = vpack.c.b16 %v220, %v219
    %v297 = vpack.c.b16 %v222, %v221
    %v298 = vpack.c.b16 %v224, %v223
    %v299 = vpack.c.b16 %v226, %v225
    %v300 = vpack.c.b16 %v228, %v227
    %v301 = vpack.c.b16 %v230, %v229
    %v302 = vpack.c.b16 %v232, %v231
    %v303 = vpack.c.b16 %v234, %v233
    %v304 = vpack.c.b16 %v236, %v235
    %v305 = vpack.c.b16 %v238, %v237
    %v306 = vpack.c.b16 %v240, %v239
    %v307 = vpack.c.b16 %v242, %v241
    %v308 = vpack.c.b16 %v244, %v243
    %v309 = vpack.c.b16 %v246, %v245
    %v310 = vpack.c.b16 %v248, %v247
    %v311 = vpack.c.b16 %v250, %v249
    %v312 = vpack.c.b16 %v252, %v251
    %v313 = vpack.c.b16 %v254, %v253
    %v314 = vpack.c.b16 %v256, %v255
    %v315 = vpack.c.b16 %v258, %v257
    %v316 = vpack.c.b16 %v260, %v259
    %v317 = vpack.c.b16 %v262, %v261
    %v318 = vpack.c.b16 %v264, %v263
    %v319 = vpack.c.b16 %v266, %v265
    %v320 = vpack.c.b16 %v268, %v267
    %v321 = vpack.c.b16 %v270, %v269
    %v322 = vpack.c.b16 %v272, %v271
    %v323 = vpack.c.b16 %v274, %v273
    %v324 = vpack.c.b16 %v276, %v275
    %v325 = vpack.c.b16 %v278, %v277
    %v326 = vpack.c.b16 %v280, %v279
    %v327 = vpack.c.b16 %v282, %v281
    %v328 = vpack.c.b16 %v284, %v283
    %v329 = vpack.c.b16 %v286, %v285
    %v330 = vpack.c.b16 %v288, %v287
    %v331 = vpack.c.b16 %v290, %v289
    %v332 = vpack.c.b16 %v292, %v291
    %373 = vmatprep.subr.bf16.mxu0 0
    %374 = vmatpush1.bf16.msra.mxu0 %v300
    %375 = vmatprep.subr.bf16.mxu0 0
    %376 = vmatpush1.bf16.msra.mxu0 %v299
    %377 = vmatprep.subr.bf16.mxu0 0
    %378 = vmatpush1.bf16.msra.mxu0 %v298
    %379 = vmatprep.subr.bf16.mxu0 0
    %380 = vmatpush1.bf16.msra.mxu0 %v297
    %381 = vmatprep.subr.bf16.mxu0 0
    %382 = vmatpush1.bf16.msra.mxu0 %v296
    %383 = vmatprep.subr.bf16.mxu0 0
    %384 = vmatpush1.bf16.msra.mxu0 %v295
    %385 = vmatprep.subr.bf16.mxu0 0
    %386 = vmatpush1.bf16.msra.mxu0 %v294
    %387 = vmatprep.subr.bf16.mxu0 0
    %388 = vmatpush1.bf16.msra.mxu0 %v293
    %389 = vmatprep.subr.bf16.mxu0 0
    %390 = vmatpush2.bf16.msra.mxu0 %v308
    %391 = vmatprep.subr.bf16.mxu0 0
    %392 = vmatpush2.bf16.msra.mxu0 %v307
    %393 = vmatprep.subr.bf16.mxu0 0
    %394 = vmatpush2.bf16.msra.mxu0 %v306
    %395 = vmatprep.subr.bf16.mxu0 0
    %396 = vmatpush2.bf16.msra.mxu0 %v305
    %397 = vmatprep.subr.bf16.mxu0 0
    %398 = vmatpush2.bf16.msra.mxu0 %v304
    %399 = vmatprep.subr.bf16.mxu0 0
    %400 = vmatpush2.bf16.msra.mxu0 %v303
    %401 = vmatprep.subr.bf16.mxu0 0
    %402 = vmatpush2.bf16.msra.mxu0 %v302
    %403 = vmatprep.subr.bf16.mxu0 0
    %404 = vmatpush2.bf16.msra.mxu0 %v301
    %405 = vmatprep.mubr.bf16.mxu0 %v42
    %406 = vmatmul.mubr.bf16.gmra.mxu0 %v41
    %v407 = vpop.f32.mrf.mxu0
    %v408 = vadd.f32 %v131, %v407
    %v409 = vpop.f32.mrf.mxu0
    %v410 = vpop.f32.mrf.mxu0
    %v411 = vpop.f32.mrf.mxu0
    %412 = vdwg.mxu0
    %413 = vmatprep.subr.bf16.mxu0 0
    %414 = vmatpush1.bf16.msra.mxu0 %v316
    %415 = vmatprep.subr.bf16.mxu0 0
    %416 = vmatpush1.bf16.msra.mxu0 %v315
    %417 = vmatprep.subr.bf16.mxu0 0
    %418 = vmatpush1.bf16.msra.mxu0 %v314
    %419 = vmatprep.subr.bf16.mxu0 0
    %420 = vmatpush1.bf16.msra.mxu0 %v313
    %421 = vmatprep.subr.bf16.mxu0 0
    %422 = vmatpush1.bf16.msra.mxu0 %v312
    %423 = vmatprep.subr.bf16.mxu0 0
    %424 = vmatpush1.bf16.msra.mxu0 %v311
    %425 = vmatprep.subr.bf16.mxu0 0
    %426 = vmatpush1.bf16.msra.mxu0 %v310
    %427 = vmatprep.subr.bf16.mxu0 0
    %428 = vmatpush1.bf16.msra.mxu0 %v309
    %429 = vmatprep.subr.bf16.mxu0 0
    %430 = vmatpush2.bf16.msra.mxu0 %v324
    %431 = vmatprep.subr.bf16.mxu0 0
    %432 = vmatpush2.bf16.msra.mxu0 %v323
    %433 = vmatprep.subr.bf16.mxu0 0
    %434 = vmatpush2.bf16.msra.mxu0 %v322
    %435 = vmatprep.subr.bf16.mxu0 0
    %436 = vmatpush2.bf16.msra.mxu0 %v321
    %437 = vmatprep.subr.bf16.mxu0 0
    %438 = vmatpush2.bf16.msra.mxu0 %v320
    %439 = vmatprep.subr.bf16.mxu0 0
    %440 = vmatpush2.bf16.msra.mxu0 %v319
    %441 = vmatprep.subr.bf16.mxu0 0
    %442 = vmatpush2.bf16.msra.mxu0 %v318
    %443 = vmatprep.subr.bf16.mxu0 0
    %444 = vmatpush2.bf16.msra.mxu0 %v317
    %445 = vmatprep.mubr.bf16.mxu0 %v44
    %446 = vmatmul.mubr.bf16.gmra.mxu0 %v43
    %v447 = vpop.f32.mrf.mxu0
    %v448 = vadd.f32 %v408, %v447
    %v449 = vpop.f32.mrf.mxu0
    %v450 = vpop.f32.mrf.mxu0
    %v451 = vpop.f32.mrf.mxu0
    %452 = vdwg.mxu0
    %453 = vmatprep.subr.bf16.mxu0 0
    %454 = vmatpush1.bf16.msra.mxu0 %v332
    %455 = vmatprep.subr.bf16.mxu0 0
    %456 = vmatpush1.bf16.msra.mxu0 %v331
    %457 = vmatprep.subr.bf16.mxu0 0
    %458 = vmatpush1.bf16.msra.mxu0 %v330
    %459 = vmatprep.subr.bf16.mxu0 0
    %460 = vmatpush1.bf16.msra.mxu0 %v329
    %461 = vmatprep.subr.bf16.mxu0 0
    %462 = vmatpush1.bf16.msra.mxu0 %v328
    %463 = vmatprep.subr.bf16.mxu0 0
    %464 = vmatpush1.bf16.msra.mxu0 %v327
    %465 = vmatprep.subr.bf16.mxu0 0
    %466 = vmatpush1.bf16.msra.mxu0 %v326
    %467 = vmatprep.subr.bf16.mxu0 0
    %468 = vmatpush1.bf16.msra.mxu0 %v325
    %469 = vmatprep.subr.bf16.mxu0 0
    %470 = vmatpush2.bf16.msra.mxu0 0
    %471 = vmatprep.subr.bf16.mxu0 0
    %472 = vmatpush2.bf16.msra.mxu0 0
    %473 = vmatprep.subr.bf16.mxu0 0
    %474 = vmatpush2.bf16.msra.mxu0 0
    %475 = vmatprep.subr.bf16.mxu0 0
    %476 = vmatpush2.bf16.msra.mxu0 0
    %477 = vmatprep.subr.bf16.mxu0 0
    %478 = vmatpush2.bf16.msra.mxu0 0
    %479 = vmatprep.subr.bf16.mxu0 0
    %480 = vmatpush2.bf16.msra.mxu0 0
    %481 = vmatprep.subr.bf16.mxu0 0
    %482 = vmatpush2.bf16.msra.mxu0 0
    %483 = vmatprep.subr.bf16.mxu0 0
    %484 = vmatpush2.bf16.msra.mxu0 0
    %485 = vmatprep.mubr.bf16.mxu0 0
    %486 = vmatmul.mubr.bf16.gmra.mxu0 %v45
    %v487 = vpop.f32.mrf.mxu0
    %v488 = vadd.f32 %v448, %v487
    %v489 = vpop.f32.mrf.mxu0
    %v490 = vpop.f32.mrf.mxu0
    %v491 = vpop.f32.mrf.mxu0
    %492 = vdwg.mxu0
    %v493 = vmul.f32 %v488, 0.1
    %v494 = vmax.f32 %v488, %v493
    %v495 = vpack.c.bf16 %v494, %v494
    %v496 = vld [vmem:[%s3] sm:$0xf]
    %v497 = vld [vmem:[%s3 + $0x4] sm:$0xf]
    %v498 = vld [vmem:[%s3 + $0x8] sm:$0xf]
    %v499 = vld [vmem:[%s3 + $0xc] sm:$0xf]
    %v500 = vld [vmem:[%s3 + $0x10] sm:$0xf]
    %v501 = vld [vmem:[%s3 + $0x14] sm:$0xf]
    %v502 = vld [vmem:[%s3 + $0x18] sm:$0xf]
    %v503 = vld [vmem:[%s3 + $0x1c] sm:$0xf]
    %v504 = vld [vmem:[%s3 + $0x20] sm:$0xf]
    %v505 = vld [vmem:[%s3 + $0x24] sm:$0xf]
    %v506 = vld [vmem:[%s3 + $0x28] sm:$0xf]
    %v507 = vld [vmem:[%s3 + $0x2c] sm:$0xf]
    %v508 = vld [vmem:[%s3 + $0x30] sm:$0xf]
    %v509 = vld [vmem:[%s3 + $0x34] sm:$0xf]
    %v510 = vld [vmem:[%s3 + $0x38] sm:$0xf]
    %v511 = vld [vmem:[%s3 + $0x3c] sm:$0xf]
    %v512 = vld [vmem:[%s4] sm:$0x1]
    %v514 = vlaneseq
    %v515 = vshrl.u32 %v514, 7
    %v516 = vsub.s32 0, %v515
    %v517 = vrot.slane %v512, %v516
    %v535 = vunpack.c.l.b16 %v496
    %v536 = vunpack.c.l.b16 %v497
    %v537 = vunpack.c.l.b16 %v498
    %v538 = vunpack.c.l.b16 %v499
    %v539 = vunpack.c.l.b16 %v500
    %v540 = vunpack.c.l.b16 %v501
    %v541 = vunpack.c.l.b16 %v502
    %v542 = vunpack.c.l.b16 %v503
    %v543 = vunpack.c.l.b16 %v504
    %v544 = vunpack.c.l.b16 %v505
    %v545 = vunpack.c.l.b16 %v506
    %v546 = vunpack.c.l.b16 %v507
    %v547 = vunpack.c.l.b16 %v508
    %v548 = vunpack.c.l.b16 %v509
    %v549 = vunpack.c.l.b16 %v510
    %v550 = vunpack.c.l.b16 %v511
    %v551 = vpack.c.b16 %v536, %v535
    %v552 = vpack.c.b16 %v538, %v537
    %v553 = vpack.c.b16 %v540, %v539
    %v554 = vpack.c.b16 %v542, %v541
    %v555 = vpack.c.b16 %v544, %v543
    %v556 = vpack.c.b16 %v546, %v545
    %v557 = vpack.c.b16 %v548, %v547
    %v558 = vpack.c.b16 %v550, %v549
    %567 = vmatprep.subr.bf16.mxu0 0
    %568 = vmatpush1.bf16.msra.mxu0 %v558
    %569 = vmatprep.subr.bf16.mxu0 0
    %570 = vmatpush1.bf16.msra.mxu0 %v557
    %571 = vmatprep.subr.bf16.mxu0 0
    %572 = vmatpush1.bf16.msra.mxu0 %v556
    %573 = vmatprep.subr.bf16.mxu0 0
    %574 = vmatpush1.bf16.msra.mxu0 %v555
    %575 = vmatprep.subr.bf16.mxu0 0
    %576 = vmatpush1.bf16.msra.mxu0 %v554
    %577 = vmatprep.subr.bf16.mxu0 0
    %578 = vmatpush1.bf16.msra.mxu0 %v553
    %579 = vmatprep.subr.bf16.mxu0 0
    %580 = vmatpush1.bf16.msra.mxu0 %v552
    %581 = vmatprep.subr.bf16.mxu0 0
    %582 = vmatpush1.bf16.msra.mxu0 %v551
    %583 = vmatprep.subr.bf16.mxu0 0
    %584 = vmatpush2.bf16.msra.mxu0 0
    %585 = vmatprep.subr.bf16.mxu0 0
    %586 = vmatpush2.bf16.msra.mxu0 0
    %587 = vmatprep.subr.bf16.mxu0 0
    %588 = vmatpush2.bf16.msra.mxu0 0
    %589 = vmatprep.subr.bf16.mxu0 0
    %590 = vmatpush2.bf16.msra.mxu0 0
    %591 = vmatprep.subr.bf16.mxu0 0
    %592 = vmatpush2.bf16.msra.mxu0 0
    %593 = vmatprep.subr.bf16.mxu0 0
    %594 = vmatpush2.bf16.msra.mxu0 0
    %595 = vmatprep.subr.bf16.mxu0 0
    %596 = vmatpush2.bf16.msra.mxu0 0
    %597 = vmatprep.subr.bf16.mxu0 0
    %598 = vmatpush2.bf16.msra.mxu0 0
    %599 = vmatprep.mubr.bf16.mxu0 0
    %600 = vmatmul.mubr.bf16.gmra.mxu0 %v495
    %v601 = vpop.f32.mrf.mxu0
    %v602 = vadd.f32 %v517, %v601
    %v603 = vpop.f32.mrf.mxu0
    %v604 = vpop.f32.mrf.mxu0
    %v605 = vpop.f32.mrf.mxu0
    %606 = vdwg.mxu0
    %vm607 = vcmask 818176
    %608 = vst.msk [vmem:[#allocation5] sm:$0xff] %vm607, %v602
    // Predicated region
    $region26: #{tpu_custom_call.1} parent=1 // pred_check
      _
    $region27: #{tpu_custom_call.1} parent=1 // pred_check_branch
      %610 = sbr.rel (0) target = $region29
    $region28: #{tpu_custom_call.1} parent=1 // pred_region
      %s612 = ssub.s32 128, 128
      %613 = vsyncadd [#allocation4], %s612
      %s615 = sshll.u32 [#allocation5], 4
      %s616 = int_to_ptr.vmem [resolvable:$true] %s615
      %618 = dma.vmem_to_hbm [thread:$0]  %s616, 128, %s5, [#allocation4]
    $region29: #{tpu_custom_call.1} parent=1 // pred_fallthru
      _
    // Predicated region
    $region30: #{tpu_custom_call.1} parent=1 // pred_check
      _
    $region31: #{tpu_custom_call.1} parent=1 // pred_check_branch
      %620 = sbr.rel (0) target = $region33
    $region32: #{tpu_custom_call.1} parent=1 // pred_region
      %621 = dma.done [#allocation4], 128
    $region33: #{tpu_custom_call.1} parent=1 // pred_fallthru
      _
    %622 = vsyncpa [#allocation3], 1
    %623 = vsyncpa [#allocation4], 1

</llo_original>
